<compile_context>
chip_gen: v6e
topology: v6e:2x2x1
jax: 0.10.0
libtpu: 0.0.40
codegen_flags: <defaults>
</compile_context>

<pallas_src>
import functools

import jax
import jax.numpy as jnp
from jax import lax
from jax.experimental import pallas as pl
from jax.experimental.pallas import tpu as pltpu

HIDDEN = 256
LEAKY_SLOPE = 0.01
TILE_B = 256          # max MXU M-axis tile; shrinks for small batches
LANE = 128            # TPU lane width; fused head output padded to this
VAR_MIN = 1e-4
VAR_MAX = 1.0


def _round_up(x, m):
    return (x + m - 1) // m * m


def _leaky_relu_f32(x):
    return jnp.where(x >= 0, x, jnp.float32(LEAKY_SLOPE) * x)


def sac_actor_kernel(obs_ref, w1_ref, b1_ref, w2_ref, b2_ref, wh_ref, bh_ref,
                     out_ref, *, act_dim):
    # fc1 + LeakyReLU (bf16 matmul inputs, f32 accumulate / elementwise)
    h1 = jnp.dot(obs_ref[...], w1_ref[...],
                 preferred_element_type=jnp.float32) + b1_ref[...]
    h1 = _leaky_relu_f32(h1)

    # fc2 + LeakyReLU
    h2 = jnp.dot(h1.astype(w2_ref.dtype), w2_ref[...],
                 preferred_element_type=jnp.float32) + b2_ref[...]
    h2 = _leaky_relu_f32(h2)

    # fused (means | variance | zero-pad) head, lane-dense 128-wide output
    head = jnp.dot(h2.astype(wh_ref.dtype), wh_ref[...],
                   preferred_element_type=jnp.float32) + bh_ref[...]

    # In-kernel variance clamp: columns [act_dim, 2*act_dim) are the variance
    # head; clamp only those (cheap VPU select, hidden under the MXU).
    col = lax.broadcasted_iota(jnp.int32, head.shape, 1)
    is_var = (col >= act_dim) & (col < 2 * act_dim)
    head = jnp.where(is_var,
                     jnp.clip(head, jnp.float32(VAR_MIN), jnp.float32(VAR_MAX)),
                     head)

    out_ref[...] = head.astype(out_ref.dtype)


@functools.partial(jax.jit, static_argnames=("tile_b",))
def sac_actor_forward(obs, params, *, tile_b=TILE_B):
    """SACActor forward in one batch-tiled Pallas kernel. Returns (means, var)."""
    B, obs_dim = obs.shape
    act_dim = params["wm"].shape[1]

    # ---- pack + lane-pad the fused head (wm | wv) -> (HIDDEN, head_n) ----
    head_n = _round_up(max(2 * act_dim, LANE), LANE)
    wh = jnp.concatenate([params["wm"], params["wv"]], axis=1)
    wh = jnp.pad(wh, ((0, 0), (0, head_n - 2 * act_dim)))
    bh = jnp.concatenate([params["bm"], params["bv"]], axis=1)
    bh = jnp.pad(bh, ((0, 0), (0, head_n - 2 * act_dim)))

    # bf16 matmul operands; biases stay f32 (added post-accumulation).
    w1 = params["w1"].astype(jnp.bfloat16)
    w2 = params["w2"].astype(jnp.bfloat16)
    wh = wh.astype(jnp.bfloat16)
    b1, b2 = params["b1"], params["b2"]

    # ---- batch tiling: shrink the tile for small batches, keep MXU-friendly ----
    b_tile = min(tile_b, _round_up(max(B, 1), LANE))
    b_padded = _round_up(max(B, 1), b_tile)
    obs_p = jnp.pad(obs, ((0, b_padded - B), (0, 0))).astype(jnp.bfloat16)

    grid = (b_padded // b_tile,)

    fused = pl.pallas_call(
        functools.partial(sac_actor_kernel, act_dim=act_dim),
        out_shape=jax.ShapeDtypeStruct((b_padded, head_n), jnp.float32),
        grid=grid,
        in_specs=[
            pl.BlockSpec((b_tile, obs_dim), lambda i: (i, 0)),   # obs tile
            pl.BlockSpec((obs_dim, HIDDEN), lambda i: (0, 0)),   # w1 (resident)
            pl.BlockSpec((1, HIDDEN), lambda i: (0, 0)),         # b1
            pl.BlockSpec((HIDDEN, HIDDEN), lambda i: (0, 0)),    # w2
            pl.BlockSpec((1, HIDDEN), lambda i: (0, 0)),         # b2
            pl.BlockSpec((HIDDEN, head_n), lambda i: (0, 0)),    # fused head W
            pl.BlockSpec((1, head_n), lambda i: (0, 0)),         # fused head b
        ],
        out_specs=pl.BlockSpec((b_tile, head_n), lambda i: (i, 0)),
        compiler_params=pltpu.CompilerParams(
            dimension_semantics=("parallel",),        # batch tiles -> both TCs on v7x
            vmem_limit_bytes=32 * 1024 * 1024,        # explicit; fits v7x 64 MiB VMEM
        ),
    )(obs_p, w1, b1, w2, b2, wh, bh)

    means = fused[:B, :act_dim]
    var = fused[:B, act_dim:2 * act_dim]   # already clamped in-kernel
    return means, var


def init_params(key, obs_dim, act_dim):
    """Deterministic synthetic init (PyTorch-Linear-style uniform +/- 1/sqrt(fan_in))."""
    ks = jax.random.split(key, 8)

    def lin(kw, kb, fan_in, fan_out):
        bound = 1.0 / jnp.sqrt(jnp.float32(fan_in))
        w = jax.random.uniform(kw, (fan_in, fan_out), jnp.float32, -bound, bound)
        b = jax.random.uniform(kb, (1, fan_out), jnp.float32, -bound, bound)
        return w, b

    w1, b1 = lin(ks[0], ks[1], obs_dim, HIDDEN)
    w2, b2 = lin(ks[2], ks[3], HIDDEN, HIDDEN)
    wm, bm = lin(ks[4], ks[5], HIDDEN, act_dim)
    wv, bv = lin(ks[6], ks[7], HIDDEN, act_dim)
    return dict(w1=w1, b1=b1, w2=w2, b2=b2, wm=wm, bm=bm, wv=wv, bv=bv)


def reference_forward_f32(obs, p):
    """Exact f32 math of the PyTorch module."""
    h1 = jax.nn.leaky_relu(obs @ p["w1"] + p["b1"], LEAKY_SLOPE)
    h2 = jax.nn.leaky_relu(h1 @ p["w2"] + p["b2"], LEAKY_SLOPE)
    means = h2 @ p["wm"] + p["bm"]
    var = jnp.clip(h2 @ p["wv"] + p["bv"], VAR_MIN, VAR_MAX)
    return means, var


def reference_forward_bf16(obs, p):
    """Pure-JAX reference with the same bf16-input / f32-accumulate matmuls as the kernel."""
    bf = jnp.bfloat16
    h1 = jnp.dot(obs.astype(bf), p["w1"].astype(bf),
                 preferred_element_type=jnp.float32) + p["b1"]
    h1 = _leaky_relu_f32(h1)
    h2 = jnp.dot(h1.astype(bf), p["w2"].astype(bf),
                 preferred_element_type=jnp.float32) + p["b2"]
    h2 = _leaky_relu_f32(h2)
    means = jnp.dot(h2.astype(bf), p["wm"].astype(bf),
                    preferred_element_type=jnp.float32) + p["bm"]
    var = jnp.dot(h2.astype(bf), p["wv"].astype(bf),
                  preferred_element_type=jnp.float32) + p["bv"]
    var = jnp.clip(var, VAR_MIN, VAR_MAX)
    return means, var


if __name__ == "__main__":
    key = jax.random.PRNGKey(0)
    k_obs, k_params = jax.random.split(key)

    B, OBS_DIM, ACT_DIM = 2, 16, 8
    obs = jax.random.normal(k_obs, (B, OBS_DIM), dtype=jnp.float32)
    params = init_params(k_params, OBS_DIM, ACT_DIM)

    means, var = sac_actor_forward(obs, params)
    means = jax.block_until_ready(means)
    var = jax.block_until_ready(var)

    assert means.shape == (B, ACT_DIM) and var.shape == (B, ACT_DIM)
    assert bool(jnp.all(var >= VAR_MIN)) and bool(jnp.all(var <= VAR_MAX))

    # Tight check vs a reference using the same bf16-input / f32-accumulate matmuls.
    ref_means_bf, ref_var_bf = reference_forward_bf16(obs, params)
    assert jnp.allclose(means, ref_means_bf, atol=1e-4, rtol=1e-4)
    assert jnp.allclose(var, ref_var_bf, atol=1e-4, rtol=1e-4)

    # Loose check vs the exact f32 PyTorch math (bf16 matmul-input rounding only).
    ref_means_f32, ref_var_f32 = reference_forward_f32(obs, params)
    assert jnp.allclose(means, ref_means_f32, atol=5e-2, rtol=5e-2)
    assert jnp.allclose(var, ref_var_f32, atol=5e-2, rtol=5e-2)

    print("KERNEL_OK")
</pallas_src>

<mosaic_0001>
module attributes {stable_mosaic.version = 11 : i64} {
  func.func @sac_actor_kernel(%arg0: i32, %arg1: memref<128x16xbf16, #tpu.memory_space<vmem>>, %arg2: memref<16x256xbf16, #tpu.memory_space<vmem>>, %arg3: memref<1x256xf32, #tpu.memory_space<vmem>>, %arg4: memref<256x256xbf16, #tpu.memory_space<vmem>>, %arg5: memref<1x256xf32, #tpu.memory_space<vmem>>, %arg6: memref<256x128xbf16, #tpu.memory_space<vmem>>, %arg7: memref<1x128xf32, #tpu.memory_space<vmem>>, %arg8: memref<128x128xf32, #tpu.memory_space<vmem>>) attributes {dimension_semantics = [#tpu.dimension_semantics<parallel>], iteration_bounds = array<i64: 1>, scalar_prefetch = 0 : i64, scratch_operands = 0 : i64, tpu.core_type = #tpu.core_type<tc>, window_params = [{transform_indices = @transform_0, window_bounds = array<i64: 128, 16>}, {pipeline_mode = #tpu.pipeline_mode<synchronous>, transform_indices = @transform_1, window_bounds = array<i64: 16, 256>}, {pipeline_mode = #tpu.pipeline_mode<synchronous>, transform_indices = @transform_2, window_bounds = array<i64: 1, 256>}, {pipeline_mode = #tpu.pipeline_mode<synchronous>, transform_indices = @transform_3, window_bounds = array<i64: 256, 256>}, {pipeline_mode = #tpu.pipeline_mode<synchronous>, transform_indices = @transform_4, window_bounds = array<i64: 1, 256>}, {pipeline_mode = #tpu.pipeline_mode<synchronous>, transform_indices = @transform_5, window_bounds = array<i64: 256, 128>}, {pipeline_mode = #tpu.pipeline_mode<synchronous>, transform_indices = @transform_6, window_bounds = array<i64: 1, 128>}, {transform_indices = @transform_7, window_bounds = array<i64: 128, 128>}]} {
    %c0 = arith.constant 0 : index
    %c0_0 = arith.constant 0 : index
    %0 = vector.load %arg1[%c0, %c0_0] : memref<128x16xbf16, #tpu.memory_space<vmem>>, vector<128x16xbf16>
    %c0_1 = arith.constant 0 : index
    %c0_2 = arith.constant 0 : index
    %1 = vector.load %arg2[%c0_1, %c0_2] : memref<16x256xbf16, #tpu.memory_space<vmem>>, vector<16x256xbf16>
    %cst = arith.constant dense<0.000000e+00> : vector<128x256xf32>
    %2 = tpu.matmul %0, %1, %cst {dimension_numbers = #tpu.dot_dimension_numbers<[1], [0], [0], [1], [0, 0, 1, 1], [], []>} : vector<128x16xbf16>, vector<16x256xbf16>, vector<128x256xf32> -> vector<128x256xf32>
    %c0_3 = arith.constant 0 : index
    %c0_4 = arith.constant 0 : index
    %3 = vector.load %arg3[%c0_3, %c0_4] : memref<1x256xf32, #tpu.memory_space<vmem>>, vector<1x256xf32>
    %4 = vector.broadcast %3 : vector<1x256xf32> to vector<128x256xf32>
    %5 = arith.addf %2, %4 : vector<128x256xf32>
    %cst_5 = arith.constant 0.000000e+00 : f32
    %6 = vector.broadcast %cst_5 : f32 to vector<128x256xf32>
    %7 = arith.cmpf oge, %5, %6 : vector<128x256xf32>
    %cst_6 = arith.constant 0.00999999977 : f32
    %8 = vector.broadcast %cst_6 : f32 to vector<128x256xf32>
    %9 = arith.mulf %8, %5 : vector<128x256xf32>
    %10 = arith.select %7, %5, %9 : vector<128x256xi1>, vector<128x256xf32>
    %11 = arith.truncf %10 : vector<128x256xf32> to vector<128x256xbf16>
    %c0_7 = arith.constant 0 : index
    %c0_8 = arith.constant 0 : index
    %12 = vector.load %arg4[%c0_7, %c0_8] : memref<256x256xbf16, #tpu.memory_space<vmem>>, vector<256x256xbf16>
    %cst_9 = arith.constant dense<0.000000e+00> : vector<128x256xf32>
    %13 = tpu.matmul %11, %12, %cst_9 {dimension_numbers = #tpu.dot_dimension_numbers<[1], [0], [0], [1], [0, 0, 1, 1], [], []>} : vector<128x256xbf16>, vector<256x256xbf16>, vector<128x256xf32> -> vector<128x256xf32>
    %c0_10 = arith.constant 0 : index
    %c0_11 = arith.constant 0 : index
    %14 = vector.load %arg5[%c0_10, %c0_11] : memref<1x256xf32, #tpu.memory_space<vmem>>, vector<1x256xf32>
    %15 = vector.broadcast %14 : vector<1x256xf32> to vector<128x256xf32>
    %16 = arith.addf %13, %15 : vector<128x256xf32>
    %cst_12 = arith.constant 0.000000e+00 : f32
    %17 = vector.broadcast %cst_12 : f32 to vector<128x256xf32>
    %18 = arith.cmpf oge, %16, %17 : vector<128x256xf32>
    %cst_13 = arith.constant 0.00999999977 : f32
    %19 = vector.broadcast %cst_13 : f32 to vector<128x256xf32>
    %20 = arith.mulf %19, %16 : vector<128x256xf32>
    %21 = arith.select %18, %16, %20 : vector<128x256xi1>, vector<128x256xf32>
    %22 = arith.truncf %21 : vector<128x256xf32> to vector<128x256xbf16>
    %c0_14 = arith.constant 0 : index
    %c0_15 = arith.constant 0 : index
    %23 = vector.load %arg6[%c0_14, %c0_15] : memref<256x128xbf16, #tpu.memory_space<vmem>>, vector<256x128xbf16>
    %cst_16 = arith.constant dense<0.000000e+00> : vector<128x128xf32>
    %24 = tpu.matmul %22, %23, %cst_16 {dimension_numbers = #tpu.dot_dimension_numbers<[1], [0], [0], [1], [0, 0, 1, 1], [], []>} : vector<128x256xbf16>, vector<256x128xbf16>, vector<128x128xf32> -> vector<128x128xf32>
    %c0_17 = arith.constant 0 : index
    %c0_18 = arith.constant 0 : index
    %25 = vector.load %arg7[%c0_17, %c0_18] : memref<1x128xf32, #tpu.memory_space<vmem>>, vector<1x128xf32>
    %26 = vector.broadcast %25 : vector<1x128xf32> to vector<128x128xf32>
    %27 = arith.addf %24, %26 : vector<128x128xf32>
    %28 = tpu.iota {dimensions = array<i32: 1>} : vector<128x128xi32>
    %c8_i32 = arith.constant 8 : i32
    %29 = vector.broadcast %c8_i32 : i32 to vector<128x128xi32>
    %30 = arith.cmpi sge, %28, %29 : vector<128x128xi32>
    %c16_i32 = arith.constant 16 : i32
    %31 = vector.broadcast %c16_i32 : i32 to vector<128x128xi32>
    %32 = arith.cmpi slt, %28, %31 : vector<128x128xi32>
    %33 = arith.andi %30, %32 : vector<128x128xi1>
    %cst_19 = arith.constant 9.99999974E-5 : f32
    %cst_20 = arith.constant 1.000000e+00 : f32
    %34 = vector.broadcast %cst_19 : f32 to vector<128x128xf32>
    %35 = arith.maximumf %34, %27 : vector<128x128xf32>
    %36 = vector.broadcast %cst_20 : f32 to vector<128x128xf32>
    %37 = arith.minimumf %36, %35 : vector<128x128xf32>
    %38 = arith.select %33, %37, %27 : vector<128x128xi1>, vector<128x128xf32>
    %c0_21 = arith.constant 0 : index
    %c0_22 = arith.constant 0 : index
    %39 = vector.load %arg8[%c0_21, %c0_22] : memref<128x128xf32, #tpu.memory_space<vmem>>, vector<128x128xf32>
    tpu.vector_store %arg8[%c0_21, %c0_22], %38 {strides = array<i32>} : memref<128x128xf32, #tpu.memory_space<vmem>>, vector<128x128xf32>,
    return
  }
  func.func @transform_0(%arg0: i32) -> (i32, i32) {
    %c0_i32 = arith.constant 0 : i32
    %c0_i32_0 = arith.constant 0 : i32
    return %arg0, %c0_i32 : i32, i32
  }
  func.func @transform_1(%arg0: i32) -> (i32, i32) {
    %c0_i32 = arith.constant 0 : i32
    %c0_i32_0 = arith.constant 0 : i32
    %c0_i32_1 = arith.constant 0 : i32
    return %c0_i32, %c0_i32_0 : i32, i32
  }
  func.func @transform_2(%arg0: i32) -> (i32, i32) {
    %c0_i32 = arith.constant 0 : i32
    %c0_i32_0 = arith.constant 0 : i32
    %c0_i32_1 = arith.constant 0 : i32
    return %c0_i32, %c0_i32_0 : i32, i32
  }
  func.func @transform_3(%arg0: i32) -> (i32, i32) {
    %c0_i32 = arith.constant 0 : i32
    %c0_i32_0 = arith.constant 0 : i32
    %c0_i32_1 = arith.constant 0 : i32
    return %c0_i32, %c0_i32_0 : i32, i32
  }
  func.func @transform_4(%arg0: i32) -> (i32, i32) {
    %c0_i32 = arith.constant 0 : i32
    %c0_i32_0 = arith.constant 0 : i32
    %c0_i32_1 = arith.constant 0 : i32
    return %c0_i32, %c0_i32_0 : i32, i32
  }
  func.func @transform_5(%arg0: i32) -> (i32, i32) {
    %c0_i32 = arith.constant 0 : i32
    %c0_i32_0 = arith.constant 0 : i32
    %c0_i32_1 = arith.constant 0 : i32
    return %c0_i32, %c0_i32_0 : i32, i32
  }
  func.func @transform_6(%arg0: i32) -> (i32, i32) {
    %c0_i32 = arith.constant 0 : i32
    %c0_i32_0 = arith.constant 0 : i32
    %c0_i32_1 = arith.constant 0 : i32
    return %c0_i32, %c0_i32_0 : i32, i32
  }
  func.func @transform_7(%arg0: i32) -> (i32, i32) {
    %c0_i32 = arith.constant 0 : i32
    %c0_i32_0 = arith.constant 0 : i32
    return %arg0, %c0_i32 : i32, i32
  }
}

</mosaic_0001>

<llo_original>
// kernel: sac_actor_forward.1
$region0: #{sac_actor_forward.1}
  #allocation0 [shape = 'u32[]', space=smem, size = 0x4, offset = 0x4, fixed_abs, tag = 'smem constant byte address 0x4 - core index']
  #allocation1 [shape = 'u32[144,128]{1,0:T(1,128)}', space=vmem, size = 0x12000, scoped, tag = 'internal scratch']
  %s0 = inlined_call_operand.vmem [shape: bf16[128,16], index: 0, kind: input, shape index: {}]
  %s1 = inlined_call_operand.vmem [shape: bf16[16,256], index: 1, kind: input, shape index: {}]
  %s2 = inlined_call_operand.vmem [shape: f32[1,256], index: 2, kind: input, shape index: {}]
  %s3 = inlined_call_operand.vmem [shape: bf16[256,256], index: 3, kind: input, shape index: {}]
  %s4 = inlined_call_operand.vmem [shape: f32[1,256], index: 4, kind: input, shape index: {}]
  %s5 = inlined_call_operand.vmem [shape: bf16[256,128], index: 5, kind: input, shape index: {}]
  %s6 = inlined_call_operand.vmem [shape: f32[1,128], index: 6, kind: input, shape index: {}]
  %s7 = inlined_call_operand.vmem [shape: f32[128,128], index: 7, kind: output, shape index: {}]
  %s8 = sld [smem:[#allocation0]]
  $region38: #{sac_actor_forward.1} parent=0
    _
  %s10 = ssub.s32 1, %s8
  %s11 = scalar_select 0, %s10, %s8
  // Predicated region
  $region2: #{sac_actor_forward.1} parent=0 // pred_check
    _
  $region3: #{sac_actor_forward.1} parent=0 // pred_check_branch
    %13 = sbr.rel (0) target = $region5
  $region4: #{sac_actor_forward.1} parent=0 // pred_region
    _
  $region5: #{sac_actor_forward.1} parent=0 // pred_fallthru
    _
  // Predicated region
  $region6: #{sac_actor_forward.1} parent=0 // pred_check
    _
  $region7: #{sac_actor_forward.1} parent=0 // pred_check_branch
    %15 = sbr.rel (0) target = $region9
  $region8: #{sac_actor_forward.1} parent=0 // pred_region
    _
  $region9: #{sac_actor_forward.1} parent=0 // pred_fallthru
    _
  // Predicated region
  $region10: #{sac_actor_forward.1} parent=0 // pred_check
    _
  $region11: #{sac_actor_forward.1} parent=0 // pred_check_branch
    %17 = sbr.rel (0) target = $region13
  $region12: #{sac_actor_forward.1} parent=0 // pred_region
    _
  $region13: #{sac_actor_forward.1} parent=0 // pred_fallthru
    _
  // Predicated region
  $region14: #{sac_actor_forward.1} parent=0 // pred_check
    _
  $region15: #{sac_actor_forward.1} parent=0 // pred_check_branch
    %19 = sbr.rel (0) target = $region17
  $region16: #{sac_actor_forward.1} parent=0 // pred_region
    _
  $region17: #{sac_actor_forward.1} parent=0 // pred_fallthru
    _
  // Predicated region
  $region18: #{sac_actor_forward.1} parent=0 // pred_check
    _
  $region19: #{sac_actor_forward.1} parent=0 // pred_check_branch
    %21 = sbr.rel (0) target = $region21
  $region20: #{sac_actor_forward.1} parent=0 // pred_region
    _
  $region21: #{sac_actor_forward.1} parent=0 // pred_fallthru
    _
  // Predicated region
  $region22: #{sac_actor_forward.1} parent=0 // pred_check
    _
  $region23: #{sac_actor_forward.1} parent=0 // pred_check_branch
    %23 = sbr.rel (0) target = $region25
  $region24: #{sac_actor_forward.1} parent=0 // pred_region
    _
  $region25: #{sac_actor_forward.1} parent=0 // pred_fallthru
    _
  // Predicated region
  $region26: #{sac_actor_forward.1} parent=0 // pred_check
    _
  $region27: #{sac_actor_forward.1} parent=0 // pred_check_branch
    %25 = sbr.rel (0) target = $region29
  $region28: #{sac_actor_forward.1} parent=0 // pred_region
    _
  $region29: #{sac_actor_forward.1} parent=0 // pred_fallthru
    _
  %v27 = vld [vmem:[%s0] sm:$0xf]
  %v28 = vld [vmem:[%s0 + $0x4] sm:$0xf]
  %v29 = vld [vmem:[%s0 + $0x8] sm:$0xf]
  %v30 = vld [vmem:[%s0 + $0xc] sm:$0xf]
  %v31 = vld [vmem:[%s0 + $0x10] sm:$0xf]
  %v32 = vld [vmem:[%s0 + $0x14] sm:$0xf]
  %v33 = vld [vmem:[%s0 + $0x18] sm:$0xf]
  %v34 = vld [vmem:[%s0 + $0x1c] sm:$0xf]
  %v35 = vld [vmem:[%s0 + $0x20] sm:$0xf]
  %v36 = vld [vmem:[%s0 + $0x24] sm:$0xf]
  %v37 = vld [vmem:[%s0 + $0x28] sm:$0xf]
  %v38 = vld [vmem:[%s0 + $0x2c] sm:$0xf]
  %v39 = vld [vmem:[%s0 + $0x30] sm:$0xf]
  %v40 = vld [vmem:[%s0 + $0x34] sm:$0xf]
  %v41 = vld [vmem:[%s0 + $0x38] sm:$0xf]
  %v42 = vld [vmem:[%s0 + $0x3c] sm:$0xf]
  %v43 = vld [vmem:[%s1] sm:$0xff]
  %v44 = vld [vmem:[%s1 + $0x8] sm:$0xff]
  %v45 = vld [vmem:[%s2] sm:$0x3]
  %v47 = vlaneseq
  %v48 = vshrl.u32 %v47, 7
  %v49 = vsub.s32 0, %v48
  %v50 = vrot.slane %v45, %v49
  %v51 = vlaneseq
  %v52 = vshrl.u32 %v51, 7
  %v53 = vsub.s32 1, %v52
  %v54 = vrot.slane %v45, %v53
  %v73 = vunpack.c.l.b16 %v27
  %v74 = vunpack.c.l.b16 %v28
  %v75 = vunpack.c.l.b16 %v29
  %v76 = vunpack.c.l.b16 %v30
  %v77 = vunpack.c.l.b16 %v31
  %v78 = vunpack.c.l.b16 %v32
  %v79 = vunpack.c.l.b16 %v33
  %v80 = vunpack.c.l.b16 %v34
  %v81 = vunpack.c.l.b16 %v35
  %v82 = vunpack.c.l.b16 %v36
  %v83 = vunpack.c.l.b16 %v37
  %v84 = vunpack.c.l.b16 %v38
  %v85 = vunpack.c.l.b16 %v39
  %v86 = vunpack.c.l.b16 %v40
  %v87 = vunpack.c.l.b16 %v41
  %v88 = vunpack.c.l.b16 %v42
  %v89 = vpack.c.b16 %v74, %v73
  %v90 = vpack.c.b16 %v76, %v75
  %v91 = vpack.c.b16 %v78, %v77
  %v92 = vpack.c.b16 %v80, %v79
  %v93 = vpack.c.b16 %v82, %v81
  %v94 = vpack.c.b16 %v84, %v83
  %v95 = vpack.c.b16 %v86, %v85
  %v96 = vpack.c.b16 %v88, %v87
  %v99 = vunpack.c.l.b16 %v43
  %v100 = vunpack.c.h.b16 %v43
  %v101 = vunpack.c.l.b16 %v44
  %v102 = vunpack.c.h.b16 %v44
  %v103 = vpack.c.b16 %v101, %v99
  %v104 = vpack.c.b16 %v102, %v100
  %vm107 = vcmask 130048
  %v109 = vsel %vm107, %v89, 0
  %v112 = vsel %vm107, %v90, 0
  %v115 = vsel %vm107, %v91, 0
  %v118 = vsel %vm107, %v92, 0
  %v121 = vsel %vm107, %v93, 0
  %v124 = vsel %vm107, %v94, 0
  %v127 = vsel %vm107, %v95, 0
  %v130 = vsel %vm107, %v96, 0
  %132 = vmatprep.subr.bf16.mxu0 0
  %133 = vmatpush1.bf16.msra.mxu0 0
  %134 = vmatprep.subr.bf16.mxu0 0
  %135 = vmatpush1.bf16.msra.mxu0 0
  %136 = vmatprep.subr.bf16.mxu0 0
  %137 = vmatpush1.bf16.msra.mxu0 0
  %138 = vmatprep.subr.bf16.mxu0 0
  %139 = vmatpush1.bf16.msra.mxu0 0
  %140 = vmatprep.subr.bf16.mxu0 0
  %141 = vmatpush1.bf16.msra.mxu0 0
  %142 = vmatprep.subr.bf16.mxu0 0
  %143 = vmatpush1.bf16.msra.mxu0 0
  %144 = vmatprep.subr.bf16.mxu0 0
  %145 = vmatpush1.bf16.msra.mxu0 0
  %146 = vmatprep.subr.bf16.mxu0 %v104
  %147 = vmatpush1.bf16.msra.mxu0 %v103
  %148 = vmatprep.subr.bf16.mxu0 0
  %149 = vmatpush2.bf16.msra.mxu0 0
  %150 = vmatprep.subr.bf16.mxu0 0
  %151 = vmatpush2.bf16.msra.mxu0 0
  %152 = vmatprep.subr.bf16.mxu0 0
  %153 = vmatpush2.bf16.msra.mxu0 0
  %154 = vmatprep.subr.bf16.mxu0 0
  %155 = vmatpush2.bf16.msra.mxu0 0
  %156 = vmatprep.subr.bf16.mxu0 0
  %157 = vmatpush2.bf16.msra.mxu0 0
  %158 = vmatprep.subr.bf16.mxu0 0
  %159 = vmatpush2.bf16.msra.mxu0 0
  %160 = vmatprep.subr.bf16.mxu0 0
  %161 = vmatpush2.bf16.msra.mxu0 0
  %162 = vmatprep.subr.bf16.mxu0 0
  %163 = vmatpush2.bf16.msra.mxu0 0
  %164 = vmatprep.mubr.bf16.mxu0 0
  %165 = vmatmul.mubr.bf16.gmra.mxu0 %v109
  %v166 = vpop.f32.mrf.mxu0
  %v167 = vadd.f32 %v50, %v166
  %v168 = vpop.f32.mrf.mxu0
  %v169 = vadd.f32 %v54, %v168
  %v170 = vpop.f32.mrf.mxu0
  %v171 = vadd.f32 %v50, %v170
  %v172 = vpop.f32.mrf.mxu0
  %v173 = vadd.f32 %v54, %v172
  %174 = vmatprep.mubr.bf16.mxu0 0
  %175 = vmatmul.mubr.bf16.gmra.mxu0 %v112
  %v176 = vpop.f32.mrf.mxu0
  %v177 = vadd.f32 %v50, %v176
  %v178 = vpop.f32.mrf.mxu0
  %v179 = vadd.f32 %v54, %v178
  %v180 = vpop.f32.mrf.mxu0
  %v181 = vadd.f32 %v50, %v180
  %v182 = vpop.f32.mrf.mxu0
  %v183 = vadd.f32 %v54, %v182
  %184 = vmatprep.mubr.bf16.mxu0 0
  %185 = vmatmul.mubr.bf16.gmra.mxu0 %v115
  %v186 = vpop.f32.mrf.mxu0
  %v187 = vadd.f32 %v50, %v186
  %v188 = vpop.f32.mrf.mxu0
  %v189 = vadd.f32 %v54, %v188
  %v190 = vpop.f32.mrf.mxu0
  %v191 = vadd.f32 %v50, %v190
  %v192 = vpop.f32.mrf.mxu0
  %v193 = vadd.f32 %v54, %v192
  %194 = vmatprep.mubr.bf16.mxu0 0
  %195 = vmatmul.mubr.bf16.gmra.mxu0 %v118
  %v196 = vpop.f32.mrf.mxu0
  %v197 = vadd.f32 %v50, %v196
  %v198 = vpop.f32.mrf.mxu0
  %v199 = vadd.f32 %v54, %v198
  %v200 = vpop.f32.mrf.mxu0
  %v201 = vadd.f32 %v50, %v200
  %v202 = vpop.f32.mrf.mxu0
  %v203 = vadd.f32 %v54, %v202
  %204 = vmatprep.mubr.bf16.mxu0 0
  %205 = vmatmul.mubr.bf16.gmra.mxu0 %v121
  %v206 = vpop.f32.mrf.mxu0
  %v207 = vadd.f32 %v50, %v206
  %v208 = vpop.f32.mrf.mxu0
  %v209 = vadd.f32 %v54, %v208
  %v210 = vpop.f32.mrf.mxu0
  %v211 = vadd.f32 %v50, %v210
  %v212 = vpop.f32.mrf.mxu0
  %v213 = vadd.f32 %v54, %v212
  %214 = vmatprep.mubr.bf16.mxu0 0
  %215 = vmatmul.mubr.bf16.gmra.mxu0 %v124
  %v216 = vpop.f32.mrf.mxu0
  %v217 = vadd.f32 %v50, %v216
  %v218 = vpop.f32.mrf.mxu0
  %v219 = vadd.f32 %v54, %v218
  %v220 = vpop.f32.mrf.mxu0
  %v221 = vadd.f32 %v50, %v220
  %v222 = vpop.f32.mrf.mxu0
  %v223 = vadd.f32 %v54, %v222
  %224 = vmatprep.mubr.bf16.mxu0 0
  %225 = vmatmul.mubr.bf16.gmra.mxu0 %v127
  %v226 = vpop.f32.mrf.mxu0
  %v227 = vadd.f32 %v50, %v226
  %v228 = vpop.f32.mrf.mxu0
  %v229 = vadd.f32 %v54, %v228
  %v230 = vpop.f32.mrf.mxu0
  %v231 = vadd.f32 %v50, %v230
  %v232 = vpop.f32.mrf.mxu0
  %v233 = vadd.f32 %v54, %v232
  %234 = vmatprep.mubr.bf16.mxu0 0
  %235 = vmatmul.mubr.bf16.gmra.mxu0 %v130
  %v236 = vpop.f32.mrf.mxu0
  %v237 = vadd.f32 %v50, %v236
  %v238 = vpop.f32.mrf.mxu0
  %v239 = vadd.f32 %v54, %v238
  %v240 = vpop.f32.mrf.mxu0
  %v241 = vadd.f32 %v50, %v240
  %v242 = vpop.f32.mrf.mxu0
  %v243 = vadd.f32 %v54, %v242
  %244 = vdwg.mxu0
  %vm245 = vcmp.ge.f32.partialorder %v167, 0.0
  %vm246 = vcmp.ge.f32.partialorder %v169, 0.0
  %vm247 = vcmp.ge.f32.partialorder %v171, 0.0
  %vm248 = vcmp.ge.f32.partialorder %v173, 0.0
  %vm249 = vcmp.ge.f32.partialorder %v177, 0.0
  %vm250 = vcmp.ge.f32.partialorder %v179, 0.0
  %vm251 = vcmp.ge.f32.partialorder %v181, 0.0
  %vm252 = vcmp.ge.f32.partialorder %v183, 0.0
  %vm253 = vcmp.ge.f32.partialorder %v187, 0.0
  %vm254 = vcmp.ge.f32.partialorder %v189, 0.0
  %vm255 = vcmp.ge.f32.partialorder %v191, 0.0
  %vm256 = vcmp.ge.f32.partialorder %v193, 0.0
  %vm257 = vcmp.ge.f32.partialorder %v197, 0.0
  %vm258 = vcmp.ge.f32.partialorder %v199, 0.0
  %vm259 = vcmp.ge.f32.partialorder %v201, 0.0
  %vm260 = vcmp.ge.f32.partialorder %v203, 0.0
  %vm261 = vcmp.ge.f32.partialorder %v207, 0.0
  %vm262 = vcmp.ge.f32.partialorder %v209, 0.0
  %vm263 = vcmp.ge.f32.partialorder %v211, 0.0
  %vm264 = vcmp.ge.f32.partialorder %v213, 0.0
  %vm265 = vcmp.ge.f32.partialorder %v217, 0.0
  %vm266 = vcmp.ge.f32.partialorder %v219, 0.0
  %vm267 = vcmp.ge.f32.partialorder %v221, 0.0
  %vm268 = vcmp.ge.f32.partialorder %v223, 0.0
  %vm269 = vcmp.ge.f32.partialorder %v227, 0.0
  %vm270 = vcmp.ge.f32.partialorder %v229, 0.0
  %vm271 = vcmp.ge.f32.partialorder %v231, 0.0
  %vm272 = vcmp.ge.f32.partialorder %v233, 0.0
  %vm273 = vcmp.ge.f32.partialorder %v237, 0.0
  %vm274 = vcmp.ge.f32.partialorder %v239, 0.0
  %vm275 = vcmp.ge.f32.partialorder %v241, 0.0
  %vm276 = vcmp.ge.f32.partialorder %v243, 0.0
  %v277 = vmul.f32 %v167, 0.01
  %v278 = vmul.f32 %v169, 0.01
  %v279 = vmul.f32 %v171, 0.01
  %v280 = vmul.f32 %v173, 0.01
  %v281 = vmul.f32 %v177, 0.01
  %v282 = vmul.f32 %v179, 0.01
  %v283 = vmul.f32 %v181, 0.01
  %v284 = vmul.f32 %v183, 0.01
  %v285 = vmul.f32 %v187, 0.01
  %v286 = vmul.f32 %v189, 0.01
  %v287 = vmul.f32 %v191, 0.01
  %v288 = vmul.f32 %v193, 0.01
  %v289 = vmul.f32 %v197, 0.01
  %v290 = vmul.f32 %v199, 0.01
  %v291 = vmul.f32 %v201, 0.01
  %v292 = vmul.f32 %v203, 0.01
  %v293 = vmul.f32 %v207, 0.01
  %v294 = vmul.f32 %v209, 0.01
  %v295 = vmul.f32 %v211, 0.01
  %v296 = vmul.f32 %v213, 0.01
  %v297 = vmul.f32 %v217, 0.01
  %v298 = vmul.f32 %v219, 0.01
  %v299 = vmul.f32 %v221, 0.01
  %v300 = vmul.f32 %v223, 0.01
  %v301 = vmul.f32 %v227, 0.01
  %v302 = vmul.f32 %v229, 0.01
  %v303 = vmul.f32 %v231, 0.01
  %v304 = vmul.f32 %v233, 0.01
  %v305 = vmul.f32 %v237, 0.01
  %v306 = vmul.f32 %v239, 0.01
  %v307 = vmul.f32 %v241, 0.01
  %v308 = vmul.f32 %v243, 0.01
  %v309 = vsel %vm245, %v167, %v277
  %v310 = vsel %vm246, %v169, %v278
  %v311 = vsel %vm247, %v171, %v279
  %v312 = vsel %vm248, %v173, %v280
  %v313 = vsel %vm249, %v177, %v281
  %v314 = vsel %vm250, %v179, %v282
  %v315 = vsel %vm251, %v181, %v283
  %v316 = vsel %vm252, %v183, %v284
  %v317 = vsel %vm253, %v187, %v285
  %v318 = vsel %vm254, %v189, %v286
  %v319 = vsel %vm255, %v191, %v287
  %v320 = vsel %vm256, %v193, %v288
  %v321 = vsel %vm257, %v197, %v289
  %v322 = vsel %vm258, %v199, %v290
  %v323 = vsel %vm259, %v201, %v291
  %v324 = vsel %vm260, %v203, %v292
  %v325 = vsel %vm261, %v207, %v293
  %v326 = vsel %vm262, %v209, %v294
  %v327 = vsel %vm263, %v211, %v295
  %v328 = vsel %vm264, %v213, %v296
  %v329 = vsel %vm265, %v217, %v297
  %v330 = vsel %vm266, %v219, %v298
  %v331 = vsel %vm267, %v221, %v299
  %v332 = vsel %vm268, %v223, %v300
  %v333 = vsel %vm269, %v227, %v301
  %v334 = vsel %vm270, %v229, %v302
  %v335 = vsel %vm271, %v231, %v303
  %v336 = vsel %vm272, %v233, %v304
  %v337 = vsel %vm273, %v237, %v305
  %v338 = vsel %vm274, %v239, %v306
  %v339 = vsel %vm275, %v241, %v307
  %v340 = vsel %vm276, %v243, %v308
  %v341 = vpack.c.bf16 %v311, %v309
  %v342 = vpack.c.bf16 %v312, %v310
  %v343 = vpack.c.bf16 %v315, %v313
  %v344 = vpack.c.bf16 %v316, %v314
  %v345 = vpack.c.bf16 %v319, %v317
  %v346 = vpack.c.bf16 %v320, %v318
  %v347 = vpack.c.bf16 %v323, %v321
  %v348 = vpack.c.bf16 %v324, %v322
  %v349 = vpack.c.bf16 %v327, %v325
  %v350 = vpack.c.bf16 %v328, %v326
  %v351 = vpack.c.bf16 %v331, %v329
  %v352 = vpack.c.bf16 %v332, %v330
  %v353 = vpack.c.bf16 %v335, %v333
  %v354 = vpack.c.bf16 %v336, %v334
  %v355 = vpack.c.bf16 %v339, %v337
  %v356 = vpack.c.bf16 %v340, %v338
  %v357 = vld [vmem:[%s3] sm:$0xff]
  %v358 = vld [vmem:[%s3 + $0x8] sm:$0xff]
  %v359 = vld [vmem:[%s3 + $0x10] sm:$0xff]
  %v360 = vld [vmem:[%s3 + $0x18] sm:$0xff]
  %v361 = vld [vmem:[%s3 + $0x20] sm:$0xff]
  %v362 = vld [vmem:[%s3 + $0x28] sm:$0xff]
  %v363 = vld [vmem:[%s3 + $0x30] sm:$0xff]
  %v364 = vld [vmem:[%s3 + $0x38] sm:$0xff]
  %v365 = vld [vmem:[%s3 + $0x40] sm:$0xff]
  %v366 = vld [vmem:[%s3 + $0x48] sm:$0xff]
  %v367 = vld [vmem:[%s3 + $0x50] sm:$0xff]
  %v368 = vld [vmem:[%s3 + $0x58] sm:$0xff]
  %v369 = vld [vmem:[%s3 + $0x60] sm:$0xff]
  %v370 = vld [vmem:[%s3 + $0x68] sm:$0xff]
  %v371 = vld [vmem:[%s3 + $0x70] sm:$0xff]
  %v372 = vld [vmem:[%s3 + $0x78] sm:$0xff]
  %v373 = vld [vmem:[%s3 + $0x80] sm:$0xff]
  %v374 = vld [vmem:[%s3 + $0x88] sm:$0xff]
  %v375 = vld [vmem:[%s3 + $0x90] sm:$0xff]
  %v376 = vld [vmem:[%s3 + $0x98] sm:$0xff]
  %v377 = vld [vmem:[%s3 + $0xa0] sm:$0xff]
  %v378 = vld [vmem:[%s3 + $0xa8] sm:$0xff]
  %v379 = vld [vmem:[%s3 + $0xb0] sm:$0xff]
  %v380 = vld [vmem:[%s3 + $0xb8] sm:$0xff]
  %v381 = vld [vmem:[%s3 + $0xc0] sm:$0xff]
  %v382 = vld [vmem:[%s3 + $0xc8] sm:$0xff]
  %v383 = vld [vmem:[%s3 + $0xd0] sm:$0xff]
  %v384 = vld [vmem:[%s3 + $0xd8] sm:$0xff]
  %v385 = vld [vmem:[%s3 + $0xe0] sm:$0xff]
  %v386 = vld [vmem:[%s3 + $0xe8] sm:$0xff]
  %v387 = vld [vmem:[%s3 + $0xf0] sm:$0xff]
  %v388 = vld [vmem:[%s3 + $0xf8] sm:$0xff]
  %v389 = vld [vmem:[%s4] sm:$0x3]
  %v391 = vlaneseq
  %v392 = vshrl.u32 %v391, 7
  %v393 = vsub.s32 0, %v392
  %v394 = vrot.slane %v389, %v393
  %v395 = vlaneseq
  %v396 = vshrl.u32 %v395, 7
  %v397 = vsub.s32 1, %v396
  %v398 = vrot.slane %v389, %v397
  %v433 = vunpack.c.l.b16 %v357
  %v434 = vunpack.c.h.b16 %v357
  %v435 = vunpack.c.l.b16 %v358
  %v436 = vunpack.c.h.b16 %v358
  %v437 = vunpack.c.l.b16 %v359
  %v438 = vunpack.c.h.b16 %v359
  %v439 = vunpack.c.l.b16 %v360
  %v440 = vunpack.c.h.b16 %v360
  %v441 = vunpack.c.l.b16 %v361
  %v442 = vunpack.c.h.b16 %v361
  %v443 = vunpack.c.l.b16 %v362
  %v444 = vunpack.c.h.b16 %v362
  %v445 = vunpack.c.l.b16 %v363
  %v446 = vunpack.c.h.b16 %v363
  %v447 = vunpack.c.l.b16 %v364
  %v448 = vunpack.c.h.b16 %v364
  %v449 = vunpack.c.l.b16 %v365
  %v450 = vunpack.c.h.b16 %v365
  %v451 = vunpack.c.l.b16 %v366
  %v452 = vunpack.c.h.b16 %v366
  %v453 = vunpack.c.l.b16 %v367
  %v454 = vunpack.c.h.b16 %v367
  %v455 = vunpack.c.l.b16 %v368
  %v456 = vunpack.c.h.b16 %v368
  %v457 = vunpack.c.l.b16 %v369
  %v458 = vunpack.c.h.b16 %v369
  %v459 = vunpack.c.l.b16 %v370
  %v460 = vunpack.c.h.b16 %v370
  %v461 = vunpack.c.l.b16 %v371
  %v462 = vunpack.c.h.b16 %v371
  %v463 = vunpack.c.l.b16 %v372
  %v464 = vunpack.c.h.b16 %v372
  %v465 = vunpack.c.l.b16 %v373
  %v466 = vunpack.c.h.b16 %v373
  %v467 = vunpack.c.l.b16 %v374
  %v468 = vunpack.c.h.b16 %v374
  %v469 = vunpack.c.l.b16 %v375
  %v470 = vunpack.c.h.b16 %v375
  %v471 = vunpack.c.l.b16 %v376
  %v472 = vunpack.c.h.b16 %v376
  %v473 = vunpack.c.l.b16 %v377
  %v474 = vunpack.c.h.b16 %v377
  %v475 = vunpack.c.l.b16 %v378
  %v476 = vunpack.c.h.b16 %v378
  %v477 = vunpack.c.l.b16 %v379
  %v478 = vunpack.c.h.b16 %v379
  %v479 = vunpack.c.l.b16 %v380
  %v480 = vunpack.c.h.b16 %v380
  %v481 = vunpack.c.l.b16 %v381
  %v482 = vunpack.c.h.b16 %v381
  %v483 = vunpack.c.l.b16 %v382
  %v484 = vunpack.c.h.b16 %v382
  %v485 = vunpack.c.l.b16 %v383
  %v486 = vunpack.c.h.b16 %v383
  %v487 = vunpack.c.l.b16 %v384
  %v488 = vunpack.c.h.b16 %v384
  %v489 = vunpack.c.l.b16 %v385
  %v490 = vunpack.c.h.b16 %v385
  %v491 = vunpack.c.l.b16 %v386
  %v492 = vunpack.c.h.b16 %v386
  %v493 = vunpack.c.l.b16 %v387
  %v494 = vunpack.c.h.b16 %v387
  %v495 = vunpack.c.l.b16 %v388
  %v496 = vunpack.c.h.b16 %v388
  %v497 = vpack.c.b16 %v435, %v433
  %v498 = vpack.c.b16 %v436, %v434
  %v499 = vpack.c.b16 %v439, %v437
  %v500 = vpack.c.b16 %v440, %v438
  %v501 = vpack.c.b16 %v443, %v441
  %v502 = vpack.c.b16 %v444, %v442
  %v503 = vpack.c.b16 %v447, %v445
  %v504 = vpack.c.b16 %v448, %v446
  %v505 = vpack.c.b16 %v451, %v449
  %v506 = vpack.c.b16 %v452, %v450
  %v507 = vpack.c.b16 %v455, %v453
  %v508 = vpack.c.b16 %v456, %v454
  %v509 = vpack.c.b16 %v459, %v457
  %v510 = vpack.c.b16 %v460, %v458
  %v511 = vpack.c.b16 %v463, %v461
  %v512 = vpack.c.b16 %v464, %v462
  %v513 = vpack.c.b16 %v467, %v465
  %v514 = vpack.c.b16 %v468, %v466
  %v515 = vpack.c.b16 %v471, %v469
  %v516 = vpack.c.b16 %v472, %v470
  %v517 = vpack.c.b16 %v475, %v473
  %v518 = vpack.c.b16 %v476, %v474
  %v519 = vpack.c.b16 %v479, %v477
  %v520 = vpack.c.b16 %v480, %v478
  %v521 = vpack.c.b16 %v483, %v481
  %v522 = vpack.c.b16 %v484, %v482
  %v523 = vpack.c.b16 %v487, %v485
  %v524 = vpack.c.b16 %v488, %v486
  %v525 = vpack.c.b16 %v491, %v489
  %v526 = vpack.c.b16 %v492, %v490
  %v527 = vpack.c.b16 %v495, %v493
  %v528 = vpack.c.b16 %v496, %v494
  %561 = vmatprep.subr.bf16.mxu0 %v512
  %562 = vmatpush1.bf16.msra.mxu0 %v511
  %563 = vmatprep.subr.bf16.mxu0 %v510
  %564 = vmatpush1.bf16.msra.mxu0 %v509
  %565 = vmatprep.subr.bf16.mxu0 %v508
  %566 = vmatpush1.bf16.msra.mxu0 %v507
  %567 = vmatprep.subr.bf16.mxu0 %v506
  %568 = vmatpush1.bf16.msra.mxu0 %v505
  %569 = vmatprep.subr.bf16.mxu0 %v504
  %570 = vmatpush1.bf16.msra.mxu0 %v503
  %571 = vmatprep.subr.bf16.mxu0 %v502
  %572 = vmatpush1.bf16.msra.mxu0 %v501
  %573 = vmatprep.subr.bf16.mxu0 %v500
  %574 = vmatpush1.bf16.msra.mxu0 %v499
  %575 = vmatprep.subr.bf16.mxu0 %v498
  %576 = vmatpush1.bf16.msra.mxu0 %v497
  %577 = vmatprep.subr.bf16.mxu0 %v528
  %578 = vmatpush2.bf16.msra.mxu0 %v527
  %579 = vmatprep.subr.bf16.mxu0 %v526
  %580 = vmatpush2.bf16.msra.mxu0 %v525
  %581 = vmatprep.subr.bf16.mxu0 %v524
  %582 = vmatpush2.bf16.msra.mxu0 %v523
  %583 = vmatprep.subr.bf16.mxu0 %v522
  %584 = vmatpush2.bf16.msra.mxu0 %v521
  %585 = vmatprep.subr.bf16.mxu0 %v520
  %586 = vmatpush2.bf16.msra.mxu0 %v519
  %587 = vmatprep.subr.bf16.mxu0 %v518
  %588 = vmatpush2.bf16.msra.mxu0 %v517
  %589 = vmatprep.subr.bf16.mxu0 %v516
  %590 = vmatpush2.bf16.msra.mxu0 %v515
  %591 = vmatprep.subr.bf16.mxu0 %v514
  %592 = vmatpush2.bf16.msra.mxu0 %v513
  %593 = vmatprep.mubr.bf16.mxu0 %v342
  %594 = vmatmul.mubr.bf16.gmra.mxu0 %v341
  %v595 = vpop.f32.mrf.mxu0
  %v596 = vadd.f32 %v394, %v595
  %v597 = vpop.f32.mrf.mxu0
  %v598 = vadd.f32 %v398, %v597
  %v599 = vpop.f32.mrf.mxu0
  %v600 = vadd.f32 %v394, %v599
  %v601 = vpop.f32.mrf.mxu0
  %v602 = vadd.f32 %v398, %v601
  %603 = vmatprep.mubr.bf16.mxu0 %v344
  %604 = vmatmul.mubr.bf16.gmra.mxu0 %v343
  %v605 = vpop.f32.mrf.mxu0
  %v606 = vadd.f32 %v394, %v605
  %v607 = vpop.f32.mrf.mxu0
  %v608 = vadd.f32 %v398, %v607
  %v609 = vpop.f32.mrf.mxu0
  %v610 = vadd.f32 %v394, %v609
  %v611 = vpop.f32.mrf.mxu0
  %v612 = vadd.f32 %v398, %v611
  %613 = vmatprep.mubr.bf16.mxu0 %v346
  %614 = vmatmul.mubr.bf16.gmra.mxu0 %v345
  %v615 = vpop.f32.mrf.mxu0
  %v616 = vadd.f32 %v394, %v615
  %v617 = vpop.f32.mrf.mxu0
  %v618 = vadd.f32 %v398, %v617
  %v619 = vpop.f32.mrf.mxu0
  %v620 = vadd.f32 %v394, %v619
  %v621 = vpop.f32.mrf.mxu0
  %v622 = vadd.f32 %v398, %v621
  %623 = vmatprep.mubr.bf16.mxu0 %v348
  %624 = vmatmul.mubr.bf16.gmra.mxu0 %v347
  %v625 = vpop.f32.mrf.mxu0
  %v626 = vadd.f32 %v394, %v625
  %v627 = vpop.f32.mrf.mxu0
  %v628 = vadd.f32 %v398, %v627
  %v629 = vpop.f32.mrf.mxu0
  %v630 = vadd.f32 %v394, %v629
  %v631 = vpop.f32.mrf.mxu0
  %v632 = vadd.f32 %v398, %v631
  %633 = vmatprep.mubr.bf16.mxu0 %v350
  %634 = vmatmul.mubr.bf16.gmra.mxu0 %v349
  %v635 = vpop.f32.mrf.mxu0
  %v636 = vadd.f32 %v394, %v635
  %v637 = vpop.f32.mrf.mxu0
  %v638 = vadd.f32 %v398, %v637
  %v639 = vpop.f32.mrf.mxu0
  %v640 = vadd.f32 %v394, %v639
  %v641 = vpop.f32.mrf.mxu0
  %v642 = vadd.f32 %v398, %v641
  %643 = vmatprep.mubr.bf16.mxu0 %v352
  %644 = vmatmul.mubr.bf16.gmra.mxu0 %v351
  %v645 = vpop.f32.mrf.mxu0
  %v646 = vadd.f32 %v394, %v645
  %v647 = vpop.f32.mrf.mxu0
  %v648 = vadd.f32 %v398, %v647
  %v649 = vpop.f32.mrf.mxu0
  %v650 = vadd.f32 %v394, %v649
  %v651 = vpop.f32.mrf.mxu0
  %v652 = vadd.f32 %v398, %v651
  %653 = vmatprep.mubr.bf16.mxu0 %v354
  %654 = vmatmul.mubr.bf16.gmra.mxu0 %v353
  %v655 = vpop.f32.mrf.mxu0
  %v656 = vadd.f32 %v394, %v655
  %v657 = vpop.f32.mrf.mxu0
  %v658 = vadd.f32 %v398, %v657
  %v659 = vpop.f32.mrf.mxu0
  %v660 = vadd.f32 %v394, %v659
  %v661 = vpop.f32.mrf.mxu0
  %v662 = vadd.f32 %v398, %v661
  %663 = vmatprep.mubr.bf16.mxu0 %v356
  %664 = vmatmul.mubr.bf16.gmra.mxu0 %v355
  %v665 = vpop.f32.mrf.mxu0
  %v666 = vadd.f32 %v394, %v665
  %v667 = vpop.f32.mrf.mxu0
  %v668 = vadd.f32 %v398, %v667
  %v669 = vpop.f32.mrf.mxu0
  %v670 = vadd.f32 %v394, %v669
  %v671 = vpop.f32.mrf.mxu0
  %v672 = vadd.f32 %v398, %v671
  %673 = vdwg.mxu0
  %vm674 = vcmp.ge.f32.partialorder %v596, 0.0
  %vm675 = vcmp.ge.f32.partialorder %v598, 0.0
  %vm676 = vcmp.ge.f32.partialorder %v600, 0.0
  %vm677 = vcmp.ge.f32.partialorder %v602, 0.0
  %vm678 = vcmp.ge.f32.partialorder %v606, 0.0
  %vm679 = vcmp.ge.f32.partialorder %v608, 0.0
  %vm680 = vcmp.ge.f32.partialorder %v610, 0.0
  %vm681 = vcmp.ge.f32.partialorder %v612, 0.0
  %vm682 = vcmp.ge.f32.partialorder %v616, 0.0
  %vm683 = vcmp.ge.f32.partialorder %v618, 0.0
  %vm684 = vcmp.ge.f32.partialorder %v620, 0.0
  %vm685 = vcmp.ge.f32.partialorder %v622, 0.0
  %vm686 = vcmp.ge.f32.partialorder %v626, 0.0
  %vm687 = vcmp.ge.f32.partialorder %v628, 0.0
  %vm688 = vcmp.ge.f32.partialorder %v630, 0.0
  %vm689 = vcmp.ge.f32.partialorder %v632, 0.0
  %vm690 = vcmp.ge.f32.partialorder %v636, 0.0
  %vm691 = vcmp.ge.f32.partialorder %v638, 0.0
  %vm692 = vcmp.ge.f32.partialorder %v640, 0.0
  %vm693 = vcmp.ge.f32.partialorder %v642, 0.0
  %vm694 = vcmp.ge.f32.partialorder %v646, 0.0
  %vm695 = vcmp.ge.f32.partialorder %v648, 0.0
  %vm696 = vcmp.ge.f32.partialorder %v650, 0.0
  %vm697 = vcmp.ge.f32.partialorder %v652, 0.0
  %vm698 = vcmp.ge.f32.partialorder %v656, 0.0
  %vm699 = vcmp.ge.f32.partialorder %v658, 0.0
  %vm700 = vcmp.ge.f32.partialorder %v660, 0.0
  %vm701 = vcmp.ge.f32.partialorder %v662, 0.0
  %vm702 = vcmp.ge.f32.partialorder %v666, 0.0
  %vm703 = vcmp.ge.f32.partialorder %v668, 0.0
  %vm704 = vcmp.ge.f32.partialorder %v670, 0.0
  %vm705 = vcmp.ge.f32.partialorder %v672, 0.0
  %v706 = vmul.f32 %v596, 0.01
  %v707 = vmul.f32 %v598, 0.01
  %v708 = vmul.f32 %v600, 0.01
  %v709 = vmul.f32 %v602, 0.01
  %v710 = vmul.f32 %v606, 0.01
  %v711 = vmul.f32 %v608, 0.01
  %v712 = vmul.f32 %v610, 0.01
  %v713 = vmul.f32 %v612, 0.01
  %v714 = vmul.f32 %v616, 0.01
  %v715 = vmul.f32 %v618, 0.01
  %v716 = vmul.f32 %v620, 0.01
  %v717 = vmul.f32 %v622, 0.01
  %v718 = vmul.f32 %v626, 0.01
  %v719 = vmul.f32 %v628, 0.01
  %v720 = vmul.f32 %v630, 0.01
  %v721 = vmul.f32 %v632, 0.01
  %v722 = vmul.f32 %v636, 0.01
  %v723 = vmul.f32 %v638, 0.01
  %v724 = vmul.f32 %v640, 0.01
  %v725 = vmul.f32 %v642, 0.01
  %v726 = vmul.f32 %v646, 0.01
  %v727 = vmul.f32 %v648, 0.01
  %v728 = vmul.f32 %v650, 0.01
  %v729 = vmul.f32 %v652, 0.01
  %v730 = vmul.f32 %v656, 0.01
  %v731 = vmul.f32 %v658, 0.01
  %v732 = vmul.f32 %v660, 0.01
  %v733 = vmul.f32 %v662, 0.01
  %v734 = vmul.f32 %v666, 0.01
  %v735 = vmul.f32 %v668, 0.01
  %v736 = vmul.f32 %v670, 0.01
  %v737 = vmul.f32 %v672, 0.01
  %v738 = vsel %vm674, %v596, %v706
  %v739 = vsel %vm675, %v598, %v707
  %v740 = vsel %vm676, %v600, %v708
  %v741 = vsel %vm677, %v602, %v709
  %v742 = vsel %vm678, %v606, %v710
  %v743 = vsel %vm679, %v608, %v711
  %v744 = vsel %vm680, %v610, %v712
  %v745 = vsel %vm681, %v612, %v713
  %v746 = vsel %vm682, %v616, %v714
  %v747 = vsel %vm683, %v618, %v715
  %v748 = vsel %vm684, %v620, %v716
  %v749 = vsel %vm685, %v622, %v717
  %v750 = vsel %vm686, %v626, %v718
  %v751 = vsel %vm687, %v628, %v719
  %v752 = vsel %vm688, %v630, %v720
  %v753 = vsel %vm689, %v632, %v721
  %v754 = vsel %vm690, %v636, %v722
  %v755 = vsel %vm691, %v638, %v723
  %v756 = vsel %vm692, %v640, %v724
  %v757 = vsel %vm693, %v642, %v725
  %v758 = vsel %vm694, %v646, %v726
  %v759 = vsel %vm695, %v648, %v727
  %v760 = vsel %vm696, %v650, %v728
  %v761 = vsel %vm697, %v652, %v729
  %v762 = vsel %vm698, %v656, %v730
  %v763 = vsel %vm699, %v658, %v731
  %v764 = vsel %vm700, %v660, %v732
  %v765 = vsel %vm701, %v662, %v733
  %v766 = vsel %vm702, %v666, %v734
  %v767 = vsel %vm703, %v668, %v735
  %v768 = vsel %vm704, %v670, %v736
  %v769 = vsel %vm705, %v672, %v737
  %v770 = vpack.c.bf16 %v740, %v738
  %v771 = vpack.c.bf16 %v741, %v739
  %v772 = vpack.c.bf16 %v744, %v742
  %v773 = vpack.c.bf16 %v745, %v743
  %v774 = vpack.c.bf16 %v748, %v746
  %v775 = vpack.c.bf16 %v749, %v747
  %v776 = vpack.c.bf16 %v752, %v750
  %v777 = vpack.c.bf16 %v753, %v751
  %v778 = vpack.c.bf16 %v756, %v754
  %v779 = vpack.c.bf16 %v757, %v755
  %v780 = vpack.c.bf16 %v760, %v758
  %v781 = vpack.c.bf16 %v761, %v759
  %v782 = vpack.c.bf16 %v764, %v762
  %v783 = vpack.c.bf16 %v765, %v763
  %v784 = vpack.c.bf16 %v768, %v766
  %v785 = vpack.c.bf16 %v769, %v767
  %v786 = vld [vmem:[%s5] sm:$0xf]
  %v787 = vld [vmem:[%s5 + $0x4] sm:$0xf]
  %v788 = vld [vmem:[%s5 + $0x8] sm:$0xf]
  %v789 = vld [vmem:[%s5 + $0xc] sm:$0xf]
  %v790 = vld [vmem:[%s5 + $0x10] sm:$0xf]
  %v791 = vld [vmem:[%s5 + $0x14] sm:$0xf]
  %v792 = vld [vmem:[%s5 + $0x18] sm:$0xf]
  %v793 = vld [vmem:[%s5 + $0x1c] sm:$0xf]
  %v794 = vld [vmem:[%s5 + $0x20] sm:$0xf]
  %v795 = vld [vmem:[%s5 + $0x24] sm:$0xf]
  %v796 = vld [vmem:[%s5 + $0x28] sm:$0xf]
  %v797 = vld [vmem:[%s5 + $0x2c] sm:$0xf]
  %v798 = vld [vmem:[%s5 + $0x30] sm:$0xf]
  %v799 = vld [vmem:[%s5 + $0x34] sm:$0xf]
  %v800 = vld [vmem:[%s5 + $0x38] sm:$0xf]
  %v801 = vld [vmem:[%s5 + $0x3c] sm:$0xf]
  %v802 = vld [vmem:[%s5 + $0x40] sm:$0xf]
  %v803 = vld [vmem:[%s5 + $0x44] sm:$0xf]
  %v804 = vld [vmem:[%s5 + $0x48] sm:$0xf]
  %v805 = vld [vmem:[%s5 + $0x4c] sm:$0xf]
  %v806 = vld [vmem:[%s5 + $0x50] sm:$0xf]
  %v807 = vld [vmem:[%s5 + $0x54] sm:$0xf]
  %v808 = vld [vmem:[%s5 + $0x58] sm:$0xf]
  %v809 = vld [vmem:[%s5 + $0x5c] sm:$0xf]
  %v810 = vld [vmem:[%s5 + $0x60] sm:$0xf]
  %v811 = vld [vmem:[%s5 + $0x64] sm:$0xf]
  %v812 = vld [vmem:[%s5 + $0x68] sm:$0xf]
  %v813 = vld [vmem:[%s5 + $0x6c] sm:$0xf]
  %v814 = vld [vmem:[%s5 + $0x70] sm:$0xf]
  %v815 = vld [vmem:[%s5 + $0x74] sm:$0xf]
  %v816 = vld [vmem:[%s5 + $0x78] sm:$0xf]
  %v817 = vld [vmem:[%s5 + $0x7c] sm:$0xf]
  %v818 = vld [vmem:[%s6] sm:$0x1]
  %v820 = vlaneseq
  %v821 = vshrl.u32 %v820, 7
  %v822 = vsub.s32 0, %v821
  %v823 = vrot.slane %v818, %v822
  %v857 = vunpack.c.l.b16 %v786
  %v858 = vunpack.c.l.b16 %v787
  %v859 = vunpack.c.l.b16 %v788
  %v860 = vunpack.c.l.b16 %v789
  %v861 = vunpack.c.l.b16 %v790
  %v862 = vunpack.c.l.b16 %v791
  %v863 = vunpack.c.l.b16 %v792
  %v864 = vunpack.c.l.b16 %v793
  %v865 = vunpack.c.l.b16 %v794
  %v866 = vunpack.c.l.b16 %v795
  %v867 = vunpack.c.l.b16 %v796
  %v868 = vunpack.c.l.b16 %v797
  %v869 = vunpack.c.l.b16 %v798
  %v870 = vunpack.c.l.b16 %v799
  %v871 = vunpack.c.l.b16 %v800
  %v872 = vunpack.c.l.b16 %v801
  %v873 = vunpack.c.l.b16 %v802
  %v874 = vunpack.c.l.b16 %v803
  %v875 = vunpack.c.l.b16 %v804
  %v876 = vunpack.c.l.b16 %v805
  %v877 = vunpack.c.l.b16 %v806
  %v878 = vunpack.c.l.b16 %v807
  %v879 = vunpack.c.l.b16 %v808
  %v880 = vunpack.c.l.b16 %v809
  %v881 = vunpack.c.l.b16 %v810
  %v882 = vunpack.c.l.b16 %v811
  %v883 = vunpack.c.l.b16 %v812
  %v884 = vunpack.c.l.b16 %v813
  %v885 = vunpack.c.l.b16 %v814
  %v886 = vunpack.c.l.b16 %v815
  %v887 = vunpack.c.l.b16 %v816
  %v888 = vunpack.c.l.b16 %v817
  %v889 = vpack.c.b16 %v858, %v857
  %v890 = vpack.c.b16 %v860, %v859
  %v891 = vpack.c.b16 %v862, %v861
  %v892 = vpack.c.b16 %v864, %v863
  %v893 = vpack.c.b16 %v866, %v865
  %v894 = vpack.c.b16 %v868, %v867
  %v895 = vpack.c.b16 %v870, %v869
  %v896 = vpack.c.b16 %v872, %v871
  %v897 = vpack.c.b16 %v874, %v873
  %v898 = vpack.c.b16 %v876, %v875
  %v899 = vpack.c.b16 %v878, %v877
  %v900 = vpack.c.b16 %v880, %v879
  %v901 = vpack.c.b16 %v882, %v881
  %v902 = vpack.c.b16 %v884, %v883
  %v903 = vpack.c.b16 %v886, %v885
  %v904 = vpack.c.b16 %v888, %v887
  %921 = vmatprep.subr.bf16.mxu0 0
  %922 = vmatpush1.bf16.msra.mxu0 %v896
  %923 = vmatprep.subr.bf16.mxu0 0
  %924 = vmatpush1.bf16.msra.mxu0 %v895
  %925 = vmatprep.subr.bf16.mxu0 0
  %926 = vmatpush1.bf16.msra.mxu0 %v894
  %927 = vmatprep.subr.bf16.mxu0 0
  %928 = vmatpush1.bf16.msra.mxu0 %v893
  %929 = vmatprep.subr.bf16.mxu0 0
  %930 = vmatpush1.bf16.msra.mxu0 %v892
  %931 = vmatprep.subr.bf16.mxu0 0
  %932 = vmatpush1.bf16.msra.mxu0 %v891
  %933 = vmatprep.subr.bf16.mxu0 0
  %934 = vmatpush1.bf16.msra.mxu0 %v890
  %935 = vmatprep.subr.bf16.mxu0 0
  %936 = vmatpush1.bf16.msra.mxu0 %v889
  %937 = vmatprep.subr.bf16.mxu0 0
  %938 = vmatpush2.bf16.msra.mxu0 %v904
  %939 = vmatprep.subr.bf16.mxu0 0
  %940 = vmatpush2.bf16.msra.mxu0 %v903
  %941 = vmatprep.subr.bf16.mxu0 0
  %942 = vmatpush2.bf16.msra.mxu0 %v902
  %943 = vmatprep.subr.bf16.mxu0 0
  %944 = vmatpush2.bf16.msra.mxu0 %v901
  %945 = vmatprep.subr.bf16.mxu0 0
  %946 = vmatpush2.bf16.msra.mxu0 %v900
  %947 = vmatprep.subr.bf16.mxu0 0
  %948 = vmatpush2.bf16.msra.mxu0 %v899
  %949 = vmatprep.subr.bf16.mxu0 0
  %950 = vmatpush2.bf16.msra.mxu0 %v898
  %951 = vmatprep.subr.bf16.mxu0 0
  %952 = vmatpush2.bf16.msra.mxu0 %v897
  %953 = vmatprep.mubr.bf16.mxu0 %v771
  %954 = vmatmul.mubr.bf16.gmra.mxu0 %v770
  %v955 = vpop.f32.mrf.mxu0
  %v956 = vadd.f32 %v823, %v955
  %v957 = vpop.f32.mrf.mxu0
  %v958 = vpop.f32.mrf.mxu0
  %v959 = vadd.f32 %v823, %v958
  %v960 = vpop.f32.mrf.mxu0
  %961 = vmatprep.mubr.bf16.mxu0 %v773
  %962 = vmatmul.mubr.bf16.gmra.mxu0 %v772
  %v963 = vpop.f32.mrf.mxu0
  %v964 = vadd.f32 %v823, %v963
  %v965 = vpop.f32.mrf.mxu0
  %v966 = vpop.f32.mrf.mxu0
  %v967 = vadd.f32 %v823, %v966
  %v968 = vpop.f32.mrf.mxu0
  %969 = vmatprep.mubr.bf16.mxu0 %v775
  %970 = vmatmul.mubr.bf16.gmra.mxu0 %v774
  %v971 = vpop.f32.mrf.mxu0
  %v972 = vadd.f32 %v823, %v971
  %v973 = vpop.f32.mrf.mxu0
  %v974 = vpop.f32.mrf.mxu0
  %v975 = vadd.f32 %v823, %v974
  %v976 = vpop.f32.mrf.mxu0
  %977 = vmatprep.mubr.bf16.mxu0 %v777
  %978 = vmatmul.mubr.bf16.gmra.mxu0 %v776
  %v979 = vpop.f32.mrf.mxu0
  %v980 = vadd.f32 %v823, %v979
  %v981 = vpop.f32.mrf.mxu0
  %v982 = vpop.f32.mrf.mxu0
  %v983 = vadd.f32 %v823, %v982
  %v984 = vpop.f32.mrf.mxu0
  %985 = vmatprep.mubr.bf16.mxu0 %v779
  %986 = vmatmul.mubr.bf16.gmra.mxu0 %v778
  %v987 = vpop.f32.mrf.mxu0
  %v988 = vadd.f32 %v823, %v987
  %v989 = vpop.f32.mrf.mxu0
  %v990 = vpop.f32.mrf.mxu0
  %v991 = vadd.f32 %v823, %v990
  %v992 = vpop.f32.mrf.mxu0
  %993 = vmatprep.mubr.bf16.mxu0 %v781
  %994 = vmatmul.mubr.bf16.gmra.mxu0 %v780
  %v995 = vpop.f32.mrf.mxu0
  %v996 = vadd.f32 %v823, %v995
  %v997 = vpop.f32.mrf.mxu0
  %v998 = vpop.f32.mrf.mxu0
  %v999 = vadd.f32 %v823, %v998
  %v1000 = vpop.f32.mrf.mxu0
  %1001 = vmatprep.mubr.bf16.mxu0 %v783
  %1002 = vmatmul.mubr.bf16.gmra.mxu0 %v782
  %v1003 = vpop.f32.mrf.mxu0
  %v1004 = vadd.f32 %v823, %v1003
  %v1005 = vpop.f32.mrf.mxu0
  %v1006 = vpop.f32.mrf.mxu0
  %v1007 = vadd.f32 %v823, %v1006
  %v1008 = vpop.f32.mrf.mxu0
  %1009 = vmatprep.mubr.bf16.mxu0 %v785
  %1010 = vmatmul.mubr.bf16.gmra.mxu0 %v784
  %v1011 = vpop.f32.mrf.mxu0
  %v1012 = vadd.f32 %v823, %v1011
  %v1013 = vpop.f32.mrf.mxu0
  %v1014 = vpop.f32.mrf.mxu0
  %v1015 = vadd.f32 %v823, %v1014
  %v1016 = vpop.f32.mrf.mxu0
  %1017 = vdwg.mxu0
  %v1018 = vlaneseq
  %v1019 = vand.u32 %v1018, 127
  %vm1020 = vcmp.ge.s32.totalorder %v1019, 8
  %vm1021 = vcmp.lt.s32.totalorder %v1019, 16
  %vm1022 = vmand %vm1020, %vm1021
  %v1023 = vmax.f32 %v956, 0.0001
  %v1024 = vmax.f32 %v959, 0.0001
  %v1025 = vmax.f32 %v964, 0.0001
  %v1026 = vmax.f32 %v967, 0.0001
  %v1027 = vmax.f32 %v972, 0.0001
  %v1028 = vmax.f32 %v975, 0.0001
  %v1029 = vmax.f32 %v980, 0.0001
  %v1030 = vmax.f32 %v983, 0.0001
  %v1031 = vmax.f32 %v988, 0.0001
  %v1032 = vmax.f32 %v991, 0.0001
  %v1033 = vmax.f32 %v996, 0.0001
  %v1034 = vmax.f32 %v999, 0.0001
  %v1035 = vmax.f32 %v1004, 0.0001
  %v1036 = vmax.f32 %v1007, 0.0001
  %v1037 = vmax.f32 %v1012, 0.0001
  %v1038 = vmax.f32 %v1015, 0.0001
  %v1039 = vmin.f32 %v1023, 1.0
  %v1040 = vmin.f32 %v1024, 1.0
  %v1041 = vmin.f32 %v1025, 1.0
  %v1042 = vmin.f32 %v1026, 1.0
  %v1043 = vmin.f32 %v1027, 1.0
  %v1044 = vmin.f32 %v1028, 1.0
  %v1045 = vmin.f32 %v1029, 1.0
  %v1046 = vmin.f32 %v1030, 1.0
  %v1047 = vmin.f32 %v1031, 1.0
  %v1048 = vmin.f32 %v1032, 1.0
  %v1049 = vmin.f32 %v1033, 1.0
  %v1050 = vmin.f32 %v1034, 1.0
  %v1051 = vmin.f32 %v1035, 1.0
  %v1052 = vmin.f32 %v1036, 1.0
  %v1053 = vmin.f32 %v1037, 1.0
  %v1054 = vmin.f32 %v1038, 1.0
  %v1055 = vsel %vm1022, %v1039, %v956
  %v1056 = vsel %vm1022, %v1040, %v959
  %v1057 = vsel %vm1022, %v1041, %v964
  %v1058 = vsel %vm1022, %v1042, %v967
  %v1059 = vsel %vm1022, %v1043, %v972
  %v1060 = vsel %vm1022, %v1044, %v975
  %v1061 = vsel %vm1022, %v1045, %v980
  %v1062 = vsel %vm1022, %v1046, %v983
  %v1063 = vsel %vm1022, %v1047, %v988
  %v1064 = vsel %vm1022, %v1048, %v991
  %v1065 = vsel %vm1022, %v1049, %v996
  %v1066 = vsel %vm1022, %v1050, %v999
  %v1067 = vsel %vm1022, %v1051, %v1004
  %v1068 = vsel %vm1022, %v1052, %v1007
  %v1069 = vsel %vm1022, %v1053, %v1012
  %v1070 = vsel %vm1022, %v1054, %v1015
  %1071 = vst [vmem:[%s7] sm:$0xff] %v1055
  %1072 = vst [vmem:[%s7 + $0x8] sm:$0xff] %v1056
  %1073 = vst [vmem:[%s7 + $0x10] sm:$0xff] %v1057
  %1074 = vst [vmem:[%s7 + $0x18] sm:$0xff] %v1058
  %1075 = vst [vmem:[%s7 + $0x20] sm:$0xff] %v1059
  %1076 = vst [vmem:[%s7 + $0x28] sm:$0xff] %v1060
  %1077 = vst [vmem:[%s7 + $0x30] sm:$0xff] %v1061
  %1078 = vst [vmem:[%s7 + $0x38] sm:$0xff] %v1062
  %1079 = vst [vmem:[%s7 + $0x40] sm:$0xff] %v1063
  %1080 = vst [vmem:[%s7 + $0x48] sm:$0xff] %v1064
  %1081 = vst [vmem:[%s7 + $0x50] sm:$0xff] %v1065
  %1082 = vst [vmem:[%s7 + $0x58] sm:$0xff] %v1066
  %1083 = vst [vmem:[%s7 + $0x60] sm:$0xff] %v1067
  %1084 = vst [vmem:[%s7 + $0x68] sm:$0xff] %v1068
  %1085 = vst [vmem:[%s7 + $0x70] sm:$0xff] %v1069
  %1086 = vst [vmem:[%s7 + $0x78] sm:$0xff] %v1070
  // Predicated region
  $region30: #{sac_actor_forward.1} parent=0 // pred_check
    _
  $region31: #{sac_actor_forward.1} parent=0 // pred_check_branch
    %1088 = sbr.rel (0) target = $region33
  $region32: #{sac_actor_forward.1} parent=0 // pred_region
    _
  $region33: #{sac_actor_forward.1} parent=0 // pred_fallthru
    _
  // Predicated region
  $region34: #{sac_actor_forward.1} parent=0 // pred_check
    _
  $region35: #{sac_actor_forward.1} parent=0 // pred_check_branch
    %1090 = sbr.rel (0) target = $region37
  $region36: #{sac_actor_forward.1} parent=0 // pred_region
    _
  $region37: #{sac_actor_forward.1} parent=0 // pred_fallthru
    _

</llo_original>
